<compile_context>
chip_gen: v6e
topology: v6e:2x2x1
jax: 0.10.0
libtpu: 0.0.40
codegen_flags: <defaults>
</compile_context>

<pallas_src>
import jax
import jax.numpy as jnp
from jax.experimental import pallas as pl
from jax.experimental.pallas import tpu as pltpu

# config (configs.DefaultBaseline stand-in)
STATE_DIM = 2
N_SKILLS = 8
HIDDEN_DIM = 32
N_LAYERS = 2       # input layer + (N_LAYERS-1) hidden layers + output layer
DROPOUT = 0.1      # unused at inference
IN_DIM = STATE_DIM + N_SKILLS
# TODO(synk): kernel is specialized to N_LAYERS=2 (one hidden Linear); a
# generic n_layers would stack the hidden weights and unroll in-kernel.

# column layout of the single packed parameter buffer, shape [H, PCOLS]
C_W0 = 0                          # W0^T  -> [H, IN_DIM]
C_W1 = C_W0 + IN_DIM              # W1^T  -> [H, H]
C_W2 = C_W1 + HIDDEN_DIM          # w2    -> [H, 1]
C_B0 = C_W2 + 1                   # b0    -> [H, 1]
C_B1 = C_B0 + 1                   # b1    -> [H, 1]
C_B2 = C_B1 + 1                   # b2 (replicated scalar) -> [H, 1]
PCOLS = C_B2 + 1                  # = IN_DIM + HIDDEN_DIM + 4 = 46


def _baseline_mlp_kernel(x_ref, p_ref, o_ref):
    # Feature-major batch tile.
    x = x_ref[...]                                     # [IN_DIM, TB]

    # Static slices of the packed parameter buffer (single replicated block).
    w0t = p_ref[:, C_W0:C_W1]                          # [H, IN_DIM]
    w1t = p_ref[:, C_W1:C_W2]                          # [H, H]
    w2c = p_ref[:, C_W2:C_B0]                          # [H, 1]
    b0 = p_ref[:, C_B0:C_B1]                           # [H, 1]
    b1 = p_ref[:, C_B1:C_B2]                           # [H, 1]
    b2 = p_ref[0:1, C_B2:PCOLS]                        # [1, 1]

    # Layer 0: Linear(S+K -> H) + ReLU (concat already fused into x_t layout).
    h = jnp.dot(w0t, x, preferred_element_type=jnp.float32)   # [H, TB]
    h = jnp.maximum(h + b0, 0.0)
    # nn.Dropout omitted: eval-mode forward is identity.

    # Layer 1: Linear(H -> H) + ReLU ([H,H] @ [H,TB] MXU matmul).
    h = jnp.dot(w1t, h, preferred_element_type=jnp.float32)   # [H, TB]
    h = jnp.maximum(h + b1, 0.0)

    # Output layer: Linear(H -> 1) as VPU multiply + sublane reduction
    # (no wasteful M=1 MXU push) -> lane-dense [1, TB] store.
    out = jnp.sum(h * w2c, axis=0, keepdims=True) + b2
    o_ref[...] = out.astype(o_ref.dtype)


def init_params(key):
    """Deterministic, PyTorch-Linear-like uniform init (fan_in based)."""
    k0, k1, k2, k3, k4, k5 = jax.random.split(key, 6)

    def lin(kw, kb, fan_in, fan_out):
        bound = 1.0 / jnp.sqrt(jnp.asarray(fan_in, jnp.float32))
        w = jax.random.uniform(kw, (fan_in, fan_out), jnp.float32, -bound, bound)
        b = jax.random.uniform(kb, (fan_out,), jnp.float32, -bound, bound)
        return w, b

    w0, b0 = lin(k0, k1, IN_DIM, HIDDEN_DIM)
    w1, b1 = lin(k2, k3, HIDDEN_DIM, HIDDEN_DIM)
    w2, b2 = lin(k4, k5, HIDDEN_DIM, 1)
    return (w0, b0, w1, b1, w2, b2)


def pack_params(w0, b0, w1, b1, w2, b2):
    """Pack all parameters into one [H, PCOLS] buffer (kernel layout)."""
    packed = jnp.concatenate(
        [
            w0.T,                                      # [H, IN_DIM]
            w1.T,                                      # [H, H]
            w2.reshape(HIDDEN_DIM, 1),                 # [H, 1]
            b0.reshape(HIDDEN_DIM, 1),                 # [H, 1]
            b1.reshape(HIDDEN_DIM, 1),                 # [H, 1]
            jnp.broadcast_to(b2.reshape(1, 1), (HIDDEN_DIM, 1)),
        ],
        axis=1,
    ).astype(jnp.float32)                              # [H, PCOLS]
    assert packed.shape == (HIDDEN_DIM, PCOLS)
    return packed


def _select_tile(batch):
    """Batch tile: >=2 grid steps when possible (v7x megacore), each step as
    large as possible (amortize ~0.35us/step on serial v5e/v6e), capped at
    1024 so the two live [H, TB] f32 activations stay within the vreg file."""
    half = -(-batch // 2)                              # ceil(B / 2)
    tb = ((half + 127) // 128) * 128                   # round up to 128 lanes
    return max(128, min(1024, tb))


def baseline_forward(s, z, packed_params):
    """s: [B, STATE_DIM], z: [B, N_SKILLS] -> [B, 1]."""
    assert s.ndim == 2 and z.ndim == 2 and s.shape[0] == z.shape[0]
    B = s.shape[0]

    # Feature-major input: one lane-dense [IN_DIM, B] slab (fuses torch.cat).
    x_t = jnp.concatenate(
        [s.astype(jnp.float32).T, z.astype(jnp.float32).T], axis=0
    )                                                  # [IN_DIM, B]

    tb = _select_tile(B)
    grid = (pl.cdiv(B, tb),)                           # partial last block OK

    out_t = pl.pallas_call(
        _baseline_mlp_kernel,
        out_shape=jax.ShapeDtypeStruct((1, B), jnp.float32),
        grid_spec=pltpu.PrefetchScalarGridSpec(
            num_scalar_prefetch=0,
            grid=grid,
            in_specs=[
                pl.BlockSpec((IN_DIM, tb), lambda i: (0, i)),           # x_t tile
                pl.BlockSpec((HIDDEN_DIM, PCOLS), lambda i: (0, 0)),    # packed params
            ],
            out_specs=pl.BlockSpec((1, tb), lambda i: (0, i)),          # lane-dense out
        ),
        compiler_params=pltpu.CompilerParams(
            dimension_semantics=("parallel",)),
    )(x_t, packed_params)

    # [1, B] -> [B, 1] is a free reshape (same contiguous data).
    return out_t.reshape(B, 1)


if __name__ == "__main__":
    key = jax.random.PRNGKey(0)
    pkey, skey, zkey = jax.random.split(key, 3)

    raw = init_params(pkey)
    packed = pack_params(*raw)

    # batch = 512 -> tile 256, 2 "parallel" grid steps (keeps both v7x TCs busy;
    # only 2 serial steps on v5e/v6e).
    B = 512
    s = jax.random.normal(skey, (B, STATE_DIM), jnp.float32)
    z = jax.random.normal(zkey, (B, N_SKILLS), jnp.float32)

    out = baseline_forward(s, z, packed)
    out = jax.block_until_ready(out)

    # Sanity check against a pure-JAX reference of the same MLP.
    w0, b0, w1, b1, w2, b2 = raw
    inp = jnp.concatenate([s, z], axis=-1)
    ref = jnp.maximum(inp @ w0 + b0, 0.0)
    ref = jnp.maximum(ref @ w1 + b1, 0.0)
    ref = ref @ w2 + b2

    assert out.shape == (B, 1)
    assert jnp.allclose(out, ref, atol=1e-4, rtol=1e-4)

    print("KERNEL_OK")
</pallas_src>

<mosaic_0001>
module attributes {stable_mosaic.version = 11 : i64} {
  func.func @_baseline_mlp_kernel(%arg0: i32, %arg1: memref<10x256xf32, #tpu.memory_space<vmem>>, %arg2: memref<32x46xf32, #tpu.memory_space<vmem>>, %arg3: memref<1x256xf32, #tpu.memory_space<vmem>>) attributes {dimension_semantics = [#tpu.dimension_semantics<parallel>], iteration_bounds = array<i64: 2>, scalar_prefetch = 0 : i64, scratch_operands = 0 : i64, tpu.core_type = #tpu.core_type<tc>, window_params = [{transform_indices = @transform_0, window_bounds = array<i64: 10, 256>}, {pipeline_mode = #tpu.pipeline_mode<synchronous>, transform_indices = @transform_1, window_bounds = array<i64: 32, 46>}, {transform_indices = @transform_2, window_bounds = array<i64: 1, 256>}]} {
    %c0 = arith.constant 0 : index
    %c0_0 = arith.constant 0 : index
    %0 = vector.load %arg1[%c0, %c0_0] : memref<10x256xf32, #tpu.memory_space<vmem>>, vector<10x256xf32>
    %c0_1 = arith.constant 0 : index
    %c0_2 = arith.constant 0 : index
    %1 = vector.load %arg2[%c0_1, %c0_2] : memref<32x46xf32, #tpu.memory_space<vmem>>, vector<32x10xf32>
    %c0_3 = arith.constant 0 : index
    %c10 = arith.constant 10 : index
    %2 = vector.load %arg2[%c0_3, %c10] : memref<32x46xf32, #tpu.memory_space<vmem>>, vector<32x32xf32>
    %c0_4 = arith.constant 0 : index
    %c42 = arith.constant 42 : index
    %3 = vector.load %arg2[%c0_4, %c42] : memref<32x46xf32, #tpu.memory_space<vmem>>, vector<32x1xf32>
    %c0_5 = arith.constant 0 : index
    %c43 = arith.constant 43 : index
    %4 = vector.load %arg2[%c0_5, %c43] : memref<32x46xf32, #tpu.memory_space<vmem>>, vector<32x1xf32>
    %c0_6 = arith.constant 0 : index
    %c44 = arith.constant 44 : index
    %5 = vector.load %arg2[%c0_6, %c44] : memref<32x46xf32, #tpu.memory_space<vmem>>, vector<32x1xf32>
    %c0_7 = arith.constant 0 : index
    %c45 = arith.constant 45 : index
    %6 = vector.load %arg2[%c0_7, %c45] : memref<32x46xf32, #tpu.memory_space<vmem>>, vector<1x1xf32>
    %cst = arith.constant dense<0.000000e+00> : vector<32x256xf32>
    %7 = tpu.matmul %1, %0, %cst {dimension_numbers = #tpu.dot_dimension_numbers<[1], [0], [0], [1], [0, 0, 1, 1], [], []>} : vector<32x10xf32>, vector<10x256xf32>, vector<32x256xf32> -> vector<32x256xf32>
    %8 = vector.broadcast %4 : vector<32x1xf32> to vector<32x256xf32>
    %9 = arith.addf %7, %8 : vector<32x256xf32>
    %cst_8 = arith.constant 0.000000e+00 : f32
    %10 = vector.broadcast %cst_8 : f32 to vector<32x256xf32>
    %11 = arith.maximumf %9, %10 : vector<32x256xf32>
    %cst_9 = arith.constant dense<0.000000e+00> : vector<32x256xf32>
    %12 = tpu.matmul %2, %11, %cst_9 {dimension_numbers = #tpu.dot_dimension_numbers<[1], [0], [0], [1], [0, 0, 1, 1], [], []>} : vector<32x32xf32>, vector<32x256xf32>, vector<32x256xf32> -> vector<32x256xf32>
    %13 = vector.broadcast %5 : vector<32x1xf32> to vector<32x256xf32>
    %14 = arith.addf %12, %13 : vector<32x256xf32>
    %cst_10 = arith.constant 0.000000e+00 : f32
    %15 = vector.broadcast %cst_10 : f32 to vector<32x256xf32>
    %16 = arith.maximumf %14, %15 : vector<32x256xf32>
    %17 = vector.broadcast %3 : vector<32x1xf32> to vector<32x256xf32>
    %18 = arith.mulf %16, %17 : vector<32x256xf32>
    %cst_11 = arith.constant dense<0.000000e+00> : vector<256xf32>
    %19 = vector.multi_reduction <add>, %18, %cst_11 [0] : vector<32x256xf32> to vector<256xf32>
    %20 = vector.shape_cast %19 : vector<256xf32> to vector<1x256xf32>
    %21 = vector.broadcast %6 : vector<1x1xf32> to vector<1x256xf32>
    %22 = arith.addf %20, %21 : vector<1x256xf32>
    %c0_12 = arith.constant 0 : index
    %c0_13 = arith.constant 0 : index
    %23 = vector.load %arg3[%c0_12, %c0_13] : memref<1x256xf32, #tpu.memory_space<vmem>>, vector<1x256xf32>
    tpu.vector_store %arg3[%c0_12, %c0_13], %22 {strides = array<i32>} : memref<1x256xf32, #tpu.memory_space<vmem>>, vector<1x256xf32>,
    return
  }
  func.func @transform_0(%arg0: i32) -> (i32, i32) {
    %c0_i32 = arith.constant 0 : i32
    %c0_i32_0 = arith.constant 0 : i32
    return %c0_i32, %arg0 : i32, i32
  }
  func.func @transform_1(%arg0: i32) -> (i32, i32) {
    %c0_i32 = arith.constant 0 : i32
    %c0_i32_0 = arith.constant 0 : i32
    %c0_i32_1 = arith.constant 0 : i32
    return %c0_i32, %c0_i32_0 : i32, i32
  }
  func.func @transform_2(%arg0: i32) -> (i32, i32) {
    %c0_i32 = arith.constant 0 : i32
    %c0_i32_0 = arith.constant 0 : i32
    return %c0_i32, %arg0 : i32, i32
  }
}

</mosaic_0001>

<llo_original>
// kernel: tpu_custom_call.1
$region0: #{tpu_custom_call.1}
  #allocation0 [shape = 'u32[]', space=smem, size = 0x4, offset = 0x4, fixed_abs, tag = 'smem constant byte address 0x4 - core index']
  #allocation1 [shape = 'u32[144,128]{1,0:T(1,128)}', space=vmem, size = 0x12000, scoped, tag = 'internal scratch']
  %s0 = inlined_call_operand.hbm [shape: f32[10,512], index: 0, kind: input, shape index: {}]
  %s1 = inlined_call_operand.hbm [shape: f32[32,46], index: 1, kind: input, shape index: {}]
  %s2 = inlined_call_operand.hbm [shape: f32[1,512], index: 2, kind: output, shape index: {}]
  %s3 = sld [smem:[#allocation0]]
  $region49: #{tpu_custom_call.1} parent=0
    _
  %s5 = ssub.s32 1, %s3
  %s6 = scalar_select 0, %s5, %s3
  $region1: #{tpu_custom_call.1} parent=0
    #allocation2 [shape = 'u8[32768]{0}', space=vmem, size = 0x8000, scoped, tag = 'input window, operand 0']
    #allocation3 [shape = 's32[2]{0}', space=sflag, size = 0x8, scoped, tag = 'scoped memory for tpu_custom_call.1']
    #allocation4 [shape = 's32[2]{0}', space=sflag, size = 0x8, scoped, tag = 'scoped memory for tpu_custom_call.1']
    #allocation5 [shape = 'u8[16384]{0}', space=vmem, size = 0x4000, scoped, tag = 'input window, operand 1, single buffered']
    #allocation6 [shape = 's32[1]{0}', space=sflag, size = 0x4, scoped, tag = 'scoped memory for tpu_custom_call.1']
    #allocation7 [shape = 'u8[2048]{0}', space=vmem, size = 0x800, scoped, tag = 'output window, operand 0']
    %7 = vsyncpa [#allocation3], 0
    %s8 = scalar_lea.sflag [#allocation3], 1
    %9 = vsyncpa %s8, 0
    %10 = vsyncpa [#allocation6], 0
    %11 = vsyncpa [#allocation4], 0
    %s12 = scalar_lea.sflag [#allocation4], 1
    %13 = vsyncpa %s12, 0
    loop: start=0, step=1, limit=4
    $region2: #{tpu_custom_call.1} parent=1 // loop_pre_header
      _
    $region3: #{tpu_custom_call.1} parent=1 // loop_header
      %s15 = sphi 0, %s19
      %p16 = scmp.ge.s32.totalorder %s15, 4
      %s25 = sphi 0, %s27
      %s28 = sphi 0, %s25
      %s29 = sphi 0, %s28
      %s45 = sphi 0, %s29
      %s49 = sphi 0, %s49
      %s51 = sphi 0, %s49
      %s52 = sphi 0, %s51
      %s66 = sphi 0, %s52
      %s72 = sphi 0, %s74
      %s75 = sphi 0, %s72
      %s76 = sphi 0, %s75
      %s92 = sphi 0, %s76
    $region4: #{tpu_custom_call.1} parent=1 // loop_header_branch
      %18 = sbr.rel (%p16) target = $region8
    $region5: #{tpu_custom_call.1} parent=1 // loop_body
      %s20 = ssub.s32 %s15, 1
      %s21 = ssub.s32 %s15, 2
      %s22 = sadd.s32 %s15, 1
      %s23 = ssub.s32 %s15, %s22
      %p24 = scmp.eq.s32.totalorder %s23, 0
      %s26 = sadd.s32 %s25, 1
      %s27 = scalar_select %p24, %s25, %s26
      %p30 = pneg %p24
      %p31 = scmp.eq.s32.totalorder %s15, 1
      %p32 = por %p30, %p31
      %p33 = scmp.ne.s32.totalorder %s25, %s28
      %p34 = scmp.eq.s32.totalorder %s15, 0
      %p35 = por %p33, %p34
      %p36 = scmp.ne.s32.totalorder %s25, %s28
      %p37 = scmp.eq.s32.totalorder %s20, 1
      %p38 = por %p36, %p37
      %p39 = scmp.ne.s32.totalorder %s28, %s29
      %p40 = scmp.eq.s32.totalorder %s20, 0
      %p41 = por %p39, %p40
      %p42 = scmp.ne.s32.totalorder %s28, %s29
      %p43 = scmp.eq.s32.totalorder %s21, 1
      %p44 = por %p42, %p43
      %p46 = scmp.ne.s32.totalorder %s29, %s45
      %p47 = scmp.eq.s32.totalorder %s21, 0
      %p48 = por %p46, %p47
      %s50 = sadd.s32 %s49, 1
      %p53 = scmp.eq.s32.totalorder %s15, 1
      %p54 = scmp.ne.s32.totalorder %s49, %s51
      %p55 = scmp.eq.s32.totalorder %s15, 0
      %p56 = por %p54, %p55
      %p57 = scmp.ne.s32.totalorder %s49, %s51
      %p58 = scmp.eq.s32.totalorder %s20, 1
      %p59 = por %p57, %p58
      %p60 = scmp.ne.s32.totalorder %s51, %s52
      %p61 = scmp.eq.s32.totalorder %s20, 0
      %p62 = por %p60, %p61
      %p63 = scmp.ne.s32.totalorder %s51, %s52
      %p64 = scmp.eq.s32.totalorder %s21, 1
      %p65 = por %p63, %p64
      %p67 = scmp.ne.s32.totalorder %s52, %s66
      %p68 = scmp.eq.s32.totalorder %s21, 0
      %p69 = por %p67, %p68
      %s70 = ssub.s32 %s15, %s22
      %p71 = scmp.eq.s32.totalorder %s70, 0
      %s73 = sadd.s32 %s72, 1
      %s74 = scalar_select %p71, %s72, %s73
      %p77 = pneg %p71
      %p78 = scmp.eq.s32.totalorder %s15, 1
      %p79 = por %p77, %p78
      %p80 = scmp.ne.s32.totalorder %s72, %s75
      %p81 = scmp.eq.s32.totalorder %s15, 0
      %p82 = por %p80, %p81
      %p83 = scmp.ne.s32.totalorder %s72, %s75
      %p84 = scmp.eq.s32.totalorder %s20, 1
      %p85 = por %p83, %p84
      %p86 = scmp.ne.s32.totalorder %s75, %s76
      %p87 = scmp.eq.s32.totalorder %s20, 0
      %p88 = por %p86, %p87
      %p89 = scmp.ne.s32.totalorder %s75, %s76
      %p90 = scmp.eq.s32.totalorder %s21, 1
      %p91 = por %p89, %p90
      %p93 = scmp.ne.s32.totalorder %s76, %s92
      %p94 = scmp.eq.s32.totalorder %s21, 0
      %p95 = por %p93, %p94
      %p96 = scmp.le.s32.totalorder 1, %s15
      %p97 = scmp.lt.s32.totalorder %s15, 3
      %p98 = pnand %p96, %p97
      %p99 = pneg %p98
      // Predicated region
      $region9: #{tpu_custom_call.1} parent=5 // pred_check
        _
      $region10: #{tpu_custom_call.1} parent=5 // pred_check_branch
        %101 = sbr.rel (%p98) target = $region12
      $region11: #{tpu_custom_call.1} parent=5 // pred_region
        %s102 = ssub.s32 %s15, 1
        // Predicated region
        $region13: #{tpu_custom_call.1} parent=11 // pred_check
          %p103 = pneg %p62
        $region14: #{tpu_custom_call.1} parent=11 // pred_check_branch
          %105 = sbr.rel (%p103) target = $region16
        $region15: #{tpu_custom_call.1} parent=11 // pred_region
          %s107 = ssub.s32 512, 512
          %108 = vsyncadd [#allocation6], %s107
          %s109 = sshll.u32 [#allocation5], 4
          %s110 = int_to_ptr.vmem [resolvable:$true] %s109
          %115 = dma.hbm_to_vmem [thread:$0]  %s1, 512, %s110, [#allocation6], 128, 128, 8
        $region16: #{tpu_custom_call.1} parent=11 // pred_fallthru
          _
      $region12: #{tpu_custom_call.1} parent=5 // pred_fallthru
        _
      %p116 = scmp.lt.s32.totalorder %s15, 2
      // Predicated region
      $region17: #{tpu_custom_call.1} parent=5 // pred_check
        %p117 = pneg %p116
      $region18: #{tpu_custom_call.1} parent=5 // pred_check_branch
        %119 = sbr.rel (%p117) target = $region20
      $region19: #{tpu_custom_call.1} parent=5 // pred_region
        // Predicated region
        $region21: #{tpu_custom_call.1} parent=19 // pred_check
          %p120 = pneg %p35
        $region22: #{tpu_custom_call.1} parent=19 // pred_check_branch
          %122 = sbr.rel (%p120) target = $region24
        $region23: #{tpu_custom_call.1} parent=19 // pred_region
          %s123 = sand.u32 %s25, 1
          %s124 = scalar_lea.sflag [#allocation3], %s123
          %s125 = sand.u32 %s25, 1
          %s126 = smul.addr %s125, 32
          %s127 = scalar_lea.vmem [#allocation2], %s126
          %s128 = smul.u32 2, %s15
          %s130 = ssub.s32 512, 512
          %131 = vsyncadd %s124, %s130
          %s132 = smul.addr %s128, 128
          %s133 = scalar_lea.hbm %s0, %s132
          %s134 = sshll.u32 %s127, 4
          %s135 = int_to_ptr.vmem [resolvable:$true] %s134
          %140 = dma.hbm_to_vmem [thread:$0]  %s133, 512, %s135, %s124, 512, 256, 16
        $region24: #{tpu_custom_call.1} parent=19 // pred_fallthru
          _
      $region20: #{tpu_custom_call.1} parent=5 // pred_fallthru
        _
      %p141 = scmp.le.s32.totalorder 1, %s15
      %p142 = scmp.lt.s32.totalorder %s15, 3
      %p143 = pnand %p141, %p142
      %p144 = pneg %p143
      // Predicated region
      $region25: #{tpu_custom_call.1} parent=5 // pred_check
        _
      $region26: #{tpu_custom_call.1} parent=5 // pred_check_branch
        %146 = sbr.rel (%p143) target = $region28
      $region27: #{tpu_custom_call.1} parent=5 // pred_region
        %s147 = ssub.s32 %s15, 1
        %s148 = sand.u32 %s28, 1
        %s149 = scalar_lea.sflag [#allocation3], %s148
        %s150 = sand.u32 %s28, 1
        %s151 = smul.addr %s150, 32
        %s152 = scalar_lea.vmem [#allocation2], %s151
        // Predicated region
        $region29: #{tpu_custom_call.1} parent=27 // pred_check
          %p153 = pneg %p41
        $region30: #{tpu_custom_call.1} parent=27 // pred_check_branch
          %155 = sbr.rel (%p153) target = $region32
        $region31: #{tpu_custom_call.1} parent=27 // pred_region
          %156 = dma.done %s149, 512
        $region32: #{tpu_custom_call.1} parent=27 // pred_fallthru
          _
        // Predicated region
        $region33: #{tpu_custom_call.1} parent=27 // pred_check
          %p157 = pneg %p62
        $region34: #{tpu_custom_call.1} parent=27 // pred_check_branch
          %159 = sbr.rel (%p157) target = $region36
        $region35: #{tpu_custom_call.1} parent=27 // pred_region
          %160 = dma.done [#allocation6], 512
        $region36: #{tpu_custom_call.1} parent=27 // pred_fallthru
          _
        %s161 = sand.u32 %s28, 1
        %s162 = scalar_lea.sflag [#allocation3], %s161
        %s163 = sand.u32 %s28, 1
        %s164 = smul.addr %s163, 32
        %s165 = scalar_lea.vmem [#allocation2], %s164
        %p166 = pneg %p41
        %p167 = pneg %p38
        %p168 = pneg %p62
        %p169 = pneg %p59
        %p170 = pneg %p88
        %p171 = pneg %p85
        %s172 = sand.u32 %s75, 1
        %s173 = scalar_lea.sflag [#allocation4], %s172
        %s174 = sand.u32 %s75, 1
        %s175 = smul.addr %s174, 2
        %s176 = scalar_lea.vmem [#allocation7], %s175
        %s177 = smul.u32 2, %s20
        %s178 = smul.u32 2, %s20
        %v179 = vld [vmem:[%s152] sm:$0xff]
        %v180 = vld [vmem:[%s152 + $0x8] sm:$0xff]
        %v181 = vld [vmem:[%s152 + $0x10] sm:$0x3]
        %v182 = vld [vmem:[%s152 + $0x18] sm:$0x3]
        %v183 = vld [vmem:[#allocation5] sm:$0xff]
        %v184 = vld [vmem:[#allocation5 + $0x8] sm:$0xff]
        %v185 = vld [vmem:[#allocation5 + $0x10] sm:$0xff]
        %v186 = vld [vmem:[#allocation5 + $0x18] sm:$0xff]
        %v187 = vld [vmem:[#allocation5] sm:$0x1]
        %189 = vset.pattern.permute.xlu0 43
        %190 = vperm.xlu0 %189, %v183
        %v191 = vpop.permute.xlu0 %190
        %194 = vset.pattern.permute.xlu0 43
        %195 = vperm.xlu0 %194, %v184
        %v196 = vpop.permute.xlu0 %195
        %199 = vset.pattern.permute.xlu0 43
        %200 = vperm.xlu0 %199, %v185
        %v201 = vpop.permute.xlu0 %200
        %204 = vset.pattern.permute.xlu0 43
        %205 = vperm.xlu0 %204, %v186
        %v206 = vpop.permute.xlu0 %205
        %vm208 = vcmask 80896
        %v209 = vsel %vm208, %v183, 0
        %v211 = vsel %vm208, %v184, 0
        %v213 = vsel %vm208, %v185, 0
        %v215 = vsel %vm208, %v186, 0
        %vm217 = vcmask 1041408
        %v219 = vsel %vm217, %v181, 0
        %v222 = vsel %vm217, %v182, 0
        %224 = vmatprep.subr.mxu0 0.0
        %225 = vmatpush1.msra.mxu0 0.0
        %226 = vmatprep.subr.mxu0 0.0
        %227 = vmatpush1.msra.mxu0 0.0
        %228 = vmatprep.subr.mxu0 0.0
        %229 = vmatpush1.msra.mxu0 0.0
        %230 = vmatprep.subr.mxu0 0.0
        %231 = vmatpush1.msra.mxu0 0.0
        %232 = vmatprep.subr.mxu0 0.0
        %233 = vmatpush1.msra.mxu0 0.0
        %234 = vmatprep.subr.mxu0 0.0
        %235 = vmatpush1.msra.mxu0 0.0
        %236 = vmatprep.subr.mxu0 0.0
        %237 = vmatpush1.msra.mxu0 0.0
        %238 = vmatprep.subr.mxu0 0.0
        %239 = vmatpush1.msra.mxu0 0.0
        %240 = vmatprep.subr.mxu0 0.0
        %241 = vmatpush1.msra.mxu0 0.0
        %242 = vmatprep.subr.mxu0 0.0
        %243 = vmatpush1.msra.mxu0 0.0
        %244 = vmatprep.subr.mxu0 0.0
        %245 = vmatpush1.msra.mxu0 0.0
        %246 = vmatprep.subr.mxu0 0.0
        %247 = vmatpush1.msra.mxu0 0.0
        %248 = vmatprep.subr.mxu0 0.0
        %249 = vmatpush1.msra.mxu0 0.0
        %250 = vmatprep.subr.mxu0 0.0
        %251 = vmatpush1.msra.mxu0 0.0
        %252 = vmatprep.subr.mxu0 %v222
        %253 = vmatpush1.msra.mxu0 %v219
        %254 = vmatprep.subr.mxu0 %v180
        %255 = vmatpush1.msra.mxu0 %v179
        %256 = vmatprep.subr.mxu0 0.0
        %257 = vmatpush2.msra.mxu0 0.0
        %258 = vmatprep.subr.mxu0 0.0
        %259 = vmatpush2.msra.mxu0 0.0
        %260 = vmatprep.subr.mxu0 0.0
        %261 = vmatpush2.msra.mxu0 0.0
        %262 = vmatprep.subr.mxu0 0.0
        %263 = vmatpush2.msra.mxu0 0.0
        %264 = vmatprep.subr.mxu0 0.0
        %265 = vmatpush2.msra.mxu0 0.0
        %266 = vmatprep.subr.mxu0 0.0
        %267 = vmatpush2.msra.mxu0 0.0
        %268 = vmatprep.subr.mxu0 0.0
        %269 = vmatpush2.msra.mxu0 0.0
        %270 = vmatprep.subr.mxu0 0.0
        %271 = vmatpush2.msra.mxu0 0.0
        %272 = vmatprep.subr.mxu0 0.0
        %273 = vmatpush2.msra.mxu0 0.0
        %274 = vmatprep.subr.mxu0 0.0
        %275 = vmatpush2.msra.mxu0 0.0
        %276 = vmatprep.subr.mxu0 0.0
        %277 = vmatpush2.msra.mxu0 0.0
        %278 = vmatprep.subr.mxu0 0.0
        %279 = vmatpush2.msra.mxu0 0.0
        %280 = vmatprep.subr.mxu0 0.0
        %281 = vmatpush2.msra.mxu0 0.0
        %282 = vmatprep.subr.mxu0 0.0
        %283 = vmatpush2.msra.mxu0 0.0
        %284 = vmatprep.subr.mxu0 0.0
        %285 = vmatpush2.msra.mxu0 0.0
        %286 = vmatprep.subr.mxu0 0.0
        %287 = vmatpush2.msra.mxu0 0.0
        %288 = vmatprep.mubr.f32.mxu0 0.0
        %289 = vmatmul.mubr.f32.gmra.mxu0 %v209
        %v290 = vpop.f32.mrf.mxu0
        %v291 = vadd.f32 %v191, %v290
        %v292 = vpop.f32.mrf.mxu0
        %v293 = vadd.f32 %v191, %v292
        %294 = vmatprep.mubr.f32.mxu0 0.0
        %295 = vmatmul.mubr.f32.gmra.mxu0 %v211
        %v296 = vpop.f32.mrf.mxu0
        %v297 = vadd.f32 %v196, %v296
        %v298 = vpop.f32.mrf.mxu0
        %v299 = vadd.f32 %v196, %v298
        %300 = vmatprep.mubr.f32.mxu0 0.0
        %301 = vmatmul.mubr.f32.gmra.mxu0 %v213
        %v302 = vpop.f32.mrf.mxu0
        %v303 = vadd.f32 %v201, %v302
        %v304 = vpop.f32.mrf.mxu0
        %v305 = vadd.f32 %v201, %v304
        %306 = vmatprep.mubr.f32.mxu0 0.0
        %307 = vmatmul.mubr.f32.gmra.mxu0 %v215
        %v308 = vpop.f32.mrf.mxu0
        %v309 = vadd.f32 %v206, %v308
        %v310 = vpop.f32.mrf.mxu0
        %v311 = vadd.f32 %v206, %v310
        %312 = vdwg.mxu0
        %v313 = vmax.f32 %v291, 0.0
        %v314 = vmax.f32 %v293, 0.0
        %v315 = vmax.f32 %v297, 0.0
        %v316 = vmax.f32 %v299, 0.0
        %v317 = vmax.f32 %v303, 0.0
        %v318 = vmax.f32 %v305, 0.0
        %v319 = vmax.f32 %v309, 0.0
        %v320 = vmax.f32 %v311, 0.0
        %321 = vset.pattern.permute.xlu0 44
        %322 = vperm.xlu0 %321, %v183
        %v323 = vpop.permute.xlu0 %322
        %325 = vset.pattern.permute.xlu0 44
        %326 = vperm.xlu0 %325, %v184
        %v327 = vpop.permute.xlu0 %326
        %329 = vset.pattern.permute.xlu0 44
        %330 = vperm.xlu0 %329, %v185
        %v331 = vpop.permute.xlu0 %330
        %333 = vset.pattern.permute.xlu0 44
        %334 = vperm.xlu0 %333, %v186
        %v335 = vpop.permute.xlu0 %334
        %337 = vrot.lane.b32.xlu0 %v183, 118
        %v338 = vpop.permute.xlu0 %337
        %339 = vrot.lane.b32.xlu0 %v184, 118
        %v340 = vpop.permute.xlu0 %339
        %341 = vrot.lane.b32.xlu0 %v185, 118
        %v342 = vpop.permute.xlu0 %341
        %343 = vrot.lane.b32.xlu0 %v186, 118
        %v344 = vpop.permute.xlu0 %343
        %vm345 = vcmask 261120
        %v346 = vsel %vm345, %v338, 0
        %v348 = vsel %vm345, %v340, 0
        %v350 = vsel %vm345, %v342, 0
        %v352 = vsel %vm345, %v344, 0
        %354 = vmatprep.subr.mxu0 0.0
        %355 = vmatpush1.msra.mxu0 0.0
        %356 = vmatprep.subr.mxu0 0.0
        %357 = vmatpush1.msra.mxu0 0.0
        %358 = vmatprep.subr.mxu0 0.0
        %359 = vmatpush1.msra.mxu0 0.0
        %360 = vmatprep.subr.mxu0 0.0
        %361 = vmatpush1.msra.mxu0 0.0
        %362 = vmatprep.subr.mxu0 0.0
        %363 = vmatpush1.msra.mxu0 0.0
        %364 = vmatprep.subr.mxu0 0.0
        %365 = vmatpush1.msra.mxu0 0.0
        %366 = vmatprep.subr.mxu0 0.0
        %367 = vmatpush1.msra.mxu0 0.0
        %368 = vmatprep.subr.mxu0 0.0
        %369 = vmatpush1.msra.mxu0 0.0
        %370 = vmatprep.subr.mxu0 0.0
        %371 = vmatpush1.msra.mxu0 0.0
        %372 = vmatprep.subr.mxu0 0.0
        %373 = vmatpush1.msra.mxu0 0.0
        %374 = vmatprep.subr.mxu0 0.0
        %375 = vmatpush1.msra.mxu0 0.0
        %376 = vmatprep.subr.mxu0 0.0
        %377 = vmatpush1.msra.mxu0 0.0
        %378 = vmatprep.subr.mxu0 %v320
        %379 = vmatpush1.msra.mxu0 %v319
        %380 = vmatprep.subr.mxu0 %v318
        %381 = vmatpush1.msra.mxu0 %v317
        %382 = vmatprep.subr.mxu0 %v316
        %383 = vmatpush1.msra.mxu0 %v315
        %384 = vmatprep.subr.mxu0 %v314
        %385 = vmatpush1.msra.mxu0 %v313
        %386 = vmatprep.subr.mxu0 0.0
        %387 = vmatpush2.msra.mxu0 0.0
        %388 = vmatprep.subr.mxu0 0.0
        %389 = vmatpush2.msra.mxu0 0.0
        %390 = vmatprep.subr.mxu0 0.0
        %391 = vmatpush2.msra.mxu0 0.0
        %392 = vmatprep.subr.mxu0 0.0
        %393 = vmatpush2.msra.mxu0 0.0
        %394 = vmatprep.subr.mxu0 0.0
        %395 = vmatpush2.msra.mxu0 0.0
        %396 = vmatprep.subr.mxu0 0.0
        %397 = vmatpush2.msra.mxu0 0.0
        %398 = vmatprep.subr.mxu0 0.0
        %399 = vmatpush2.msra.mxu0 0.0
        %400 = vmatprep.subr.mxu0 0.0
        %401 = vmatpush2.msra.mxu0 0.0
        %402 = vmatprep.subr.mxu0 0.0
        %403 = vmatpush2.msra.mxu0 0.0
        %404 = vmatprep.subr.mxu0 0.0
        %405 = vmatpush2.msra.mxu0 0.0
        %406 = vmatprep.subr.mxu0 0.0
        %407 = vmatpush2.msra.mxu0 0.0
        %408 = vmatprep.subr.mxu0 0.0
        %409 = vmatpush2.msra.mxu0 0.0
        %410 = vmatprep.subr.mxu0 0.0
        %411 = vmatpush2.msra.mxu0 0.0
        %412 = vmatprep.subr.mxu0 0.0
        %413 = vmatpush2.msra.mxu0 0.0
        %414 = vmatprep.subr.mxu0 0.0
        %415 = vmatpush2.msra.mxu0 0.0
        %416 = vmatprep.subr.mxu0 0.0
        %417 = vmatpush2.msra.mxu0 0.0
        %418 = vmatprep.mubr.f32.mxu0 0.0
        %419 = vmatmul.mubr.f32.gmra.mxu0 %v346
        %v420 = vpop.f32.mrf.mxu0
        %v421 = vadd.f32 %v323, %v420
        %v422 = vpop.f32.mrf.mxu0
        %v423 = vadd.f32 %v323, %v422
        %424 = vmatprep.mubr.f32.mxu0 0.0
        %425 = vmatmul.mubr.f32.gmra.mxu0 %v348
        %v426 = vpop.f32.mrf.mxu0
        %v427 = vadd.f32 %v327, %v426
        %v428 = vpop.f32.mrf.mxu0
        %v429 = vadd.f32 %v327, %v428
        %430 = vmatprep.mubr.f32.mxu0 0.0
        %431 = vmatmul.mubr.f32.gmra.mxu0 %v350
        %v432 = vpop.f32.mrf.mxu0
        %v433 = vadd.f32 %v331, %v432
        %v434 = vpop.f32.mrf.mxu0
        %v435 = vadd.f32 %v331, %v434
        %436 = vmatprep.mubr.f32.mxu0 0.0
        %437 = vmatmul.mubr.f32.gmra.mxu0 %v352
        %v438 = vpop.f32.mrf.mxu0
        %v439 = vadd.f32 %v335, %v438
        %v440 = vpop.f32.mrf.mxu0
        %v441 = vadd.f32 %v335, %v440
        %442 = vdwg.mxu0
        %v443 = vmax.f32 %v421, 0.0
        %v444 = vmax.f32 %v423, 0.0
        %v445 = vmax.f32 %v427, 0.0
        %v446 = vmax.f32 %v429, 0.0
        %v447 = vmax.f32 %v433, 0.0
        %v448 = vmax.f32 %v435, 0.0
        %v449 = vmax.f32 %v439, 0.0
        %v450 = vmax.f32 %v441, 0.0
        %451 = vset.pattern.permute.xlu0 42
        %452 = vperm.xlu0 %451, %v183
        %v453 = vpop.permute.xlu0 %452
        %455 = vset.pattern.permute.xlu0 42
        %456 = vperm.xlu0 %455, %v184
        %v457 = vpop.permute.xlu0 %456
        %459 = vset.pattern.permute.xlu0 42
        %460 = vperm.xlu0 %459, %v185
        %v461 = vpop.permute.xlu0 %460
        %463 = vset.pattern.permute.xlu0 42
        %464 = vperm.xlu0 %463, %v186
        %v465 = vpop.permute.xlu0 %464
        %v467 = vmul.f32 %v443, %v453
        %v468 = vmul.f32 %v444, %v453
        %v469 = vmul.f32 %v445, %v457
        %v470 = vmul.f32 %v446, %v457
        %v471 = vmul.f32 %v447, %v461
        %v472 = vmul.f32 %v448, %v461
        %v473 = vmul.f32 %v449, %v465
        %v474 = vmul.f32 %v450, %v465
        %v475 = vadd.f32 %v467, %v469
        %v476 = vadd.f32 %v475, %v471
        %v477 = vadd.f32 %v476, %v473
        %v478 = vrot.slane %v477, 4
        %v479 = vadd.f32 %v477, %v478
        %v480 = vrot.slane %v479, 2
        %v481 = vadd.f32 %v479, %v480
        %v482 = vrot.slane %v481, 1
        %v483 = vadd.f32 %v481, %v482
        %v484 = vadd.f32 %v468, %v470
        %v485 = vadd.f32 %v484, %v472
        %v486 = vadd.f32 %v485, %v474
        %v487 = vrot.slane %v486, 4
        %v488 = vadd.f32 %v486, %v487
        %v489 = vrot.slane %v488, 2
        %v490 = vadd.f32 %v488, %v489
        %v491 = vrot.slane %v490, 1
        %v492 = vadd.f32 %v490, %v491
        %494 = vset.pattern.permute.xlu0 45
        %495 = vperm.xlu0 %494, %v187
        %v496 = vpop.permute.xlu0 %495
        %v498 = vadd.f32 %v483, %v496
        %v499 = vadd.f32 %v492, %v496
        %v502 = vcombine.low %v498, %v499
        %v504 = vunpack.c.l.s4 1966171168
        %v505 = vunpack.c.0.s8 %v504
        %v506 = vlaneseq
        %v507 = vshrl.u32 %v506, 7
        %v508 = vsub.s32 %v505, %v507
        %v509 = vrot.slane %v502, %v508
        %v511 = vunpack.c.l.s4 1966171168
        %v512 = vunpack.c.0.s8 %v511
        %v513 = vlaneseq
        %v514 = vshrl.u32 %v513, 7
        %v515 = vsub.s32 %v512, %v514
        %v516 = vrot.slane %v509, %v515
        %v518 = vlaneseq
        %vm519 = vcmp.ge.s32.totalorder %v518, 0
        %vm520 = vcmp.lt.s32.totalorder %v518, 256
        %vm521 = vmand %vm519, %vm520
        %522 = vst.msk [vmem:[%s176] sm:$0x3] %vm521, %v516
        %s523 = sand.u32 %s75, 1
        %s524 = scalar_lea.sflag [#allocation4], %s523
        %s525 = sand.u32 %s75, 1
        %s526 = smul.addr %s525, 2
        %s527 = scalar_lea.vmem [#allocation7], %s526
        // Predicated region
        $region37: #{tpu_custom_call.1} parent=27 // pred_check
          %p528 = pneg %p85
        $region38: #{tpu_custom_call.1} parent=27 // pred_check_branch
          %530 = sbr.rel (%p528) target = $region40
        $region39: #{tpu_custom_call.1} parent=27 // pred_region
          %s531 = smul.u32 2, %s20
          %s533 = ssub.s32 32, 32
          %534 = vsyncadd %s524, %s533
          %s535 = smul.addr %s531, 16
          %s536 = scalar_lea.hbm %s2, %s535
          %s538 = sshll.u32 %s527, 4
          %s539 = int_to_ptr.vmem [resolvable:$true] %s538
          %541 = dma.vmem_to_hbm [thread:$0]  %s539, 32, %s536, %s524
        $region40: #{tpu_custom_call.1} parent=27 // pred_fallthru
          _
      $region28: #{tpu_custom_call.1} parent=5 // pred_fallthru
        _
      %p542 = scmp.le.s32.totalorder 2, %s15
      // Predicated region
      $region41: #{tpu_custom_call.1} parent=5 // pred_check
        %p543 = pneg %p542
      $region42: #{tpu_custom_call.1} parent=5 // pred_check_branch
        %545 = sbr.rel (%p543) target = $region44
      $region43: #{tpu_custom_call.1} parent=5 // pred_region
        %s546 = ssub.s32 %s15, 2
        // Predicated region
        $region45: #{tpu_custom_call.1} parent=43 // pred_check
          %p547 = pneg %p91
        $region46: #{tpu_custom_call.1} parent=43 // pred_check_branch
          %549 = sbr.rel (%p547) target = $region48
        $region47: #{tpu_custom_call.1} parent=43 // pred_region
          %s550 = sand.u32 %s76, 1
          %s551 = scalar_lea.sflag [#allocation4], %s550
          %s552 = sand.u32 %s76, 1
          %s553 = smul.addr %s552, 2
          %s554 = scalar_lea.vmem [#allocation7], %s553
          %555 = dma.done %s551, 32
        $region48: #{tpu_custom_call.1} parent=43 // pred_fallthru
          _
      $region44: #{tpu_custom_call.1} parent=5 // pred_fallthru
        _
    $region6: #{tpu_custom_call.1} parent=1 // loop_footer
      %s19 = sadd.s32 1, %s15
    $region7: #{tpu_custom_call.1} parent=1 // loop_footer_branch
      %14 = sbr.rel target = $region3
    $region8: #{tpu_custom_call.1} parent=1 // loop_exit
      _
    %556 = vsyncpa [#allocation3], 1
    %s557 = scalar_lea.sflag [#allocation3], 1
    %558 = vsyncpa %s557, 1
    %559 = vsyncpa [#allocation6], 1
    %560 = vsyncpa [#allocation4], 1
    %s561 = scalar_lea.sflag [#allocation4], 1
    %562 = vsyncpa %s561, 1

</llo_original>
